<compile_context>
chip_gen: v5e
topology: v5e:2x2
jax: 0.10.0
libtpu: 0.0.40
codegen_flags: <defaults>
</compile_context>

<pallas_src>
import jax
import jax.numpy as jnp
from jax.experimental import pallas as pl
from jax.experimental.pallas import tpu as pltpu


def _v_linear_kernel(x_ref, w_ref, b_ref, o_ref):
    # x_ref: (TILE_B, D) flattened board features, VMEM (pipelined per tile)
    # w_ref: (1, D)      Linear weight, VMEM-resident across all grid steps
    # b_ref: (1,)        Linear bias, SMEM scalar
    # o_ref: (TILE_B, 1) value output (V.forward has no activation)
    x = x_ref[...]                                  # f32, no redundant casts
    w = w_ref[...]                                  # (1, D) broadcasts over rows
    # Row-wise dot with the weight vector (VPU mul + XLU lane reduce); the
    # kernel is HBM-bound, so this is fully hidden under the input DMA.
    y = jnp.sum(x * w, axis=-1, keepdims=True)      # (TILE_B, 1)
    o_ref[...] = (y + b_ref[0]).astype(o_ref.dtype)


def v_forward(s, weight, bias, *, tile_b=2048):
    """Pallas equivalent of V.forward.

    s:      (B, C, X, Y, Z) float32  (or already-flat (B, D))
    weight: (1, D) float32   with D = C*X*Y*Z (PyTorch Linear weight layout)
    bias:   (1,)   float32
    returns (B, 1) float32
    """
    B = s.shape[0]
    D = weight.shape[1]
    x = s.reshape(B, D)                      # nn.Flatten() (no-op if already flat)

    if B <= tile_b:
        tb = B                               # single block == full batch dim
        b_padded = B
    else:
        assert tile_b % 8 == 0, "tile_b must be a multiple of 8 (sublane)"
        tb = tile_b
        b_padded = pl.cdiv(B, tb) * tb
        if b_padded != B:                    # pad ragged batch; sliced off below
            x = jnp.pad(x, ((0, b_padded - B), (0, 0)))

    grid = (b_padded // tb,)

    cost = pl.CostEstimate(
        flops=2 * b_padded * D,
        transcendentals=0,
        bytes_accessed=(b_padded * D + D + b_padded) * 4,
    )

    out = pl.pallas_call(
        _v_linear_kernel,
        out_shape=jax.ShapeDtypeStruct((b_padded, 1), jnp.float32),
        grid_spec=pltpu.PrefetchScalarGridSpec(
            num_scalar_prefetch=0,
            grid=grid,
            in_specs=[
                # batch-tiled input: double-buffered by the auto pipeline
                pl.BlockSpec((tb, D), lambda i: (i, 0)),
                # weight: constant block index -> stays resident in VMEM
                pl.BlockSpec((1, D), lambda i: (0, 0)),
                # bias: scalar in SMEM, no VMEM tile / extra DMA
                pl.BlockSpec(memory_space=pltpu.MemorySpace.SMEM),
            ],
            out_specs=pl.BlockSpec((tb, 1), lambda i: (i, 0)),
        ),
        compiler_params=pltpu.CompilerParams(
            dimension_semantics=("parallel",)),
        cost_estimate=cost,
    )(x, weight, bias)

    return out[:B]


if __name__ == "__main__":
    # Shapes consistent with the module:
    #   num_channels = 4, board = 4 x 4 x 4  ->  input_num = 4*4*4*4 = 256
    B, C, X, Y, Z = 2, 4, 4, 4, 4
    D = C * X * Y * Z

    key = jax.random.PRNGKey(0)
    k_s, k_w, k_b, k_s2 = jax.random.split(key, 4)

    s = jax.random.normal(k_s, (B, C, X, Y, Z), dtype=jnp.float32)
    bound = 1.0 / (D ** 0.5)
    # Deterministic synthetic Linear params (PyTorch shapes: W (1, D), b (1,))
    weight = jax.random.uniform(k_w, (1, D), dtype=jnp.float32,
                                minval=-bound, maxval=bound)
    bias = jax.random.uniform(k_b, (1,), dtype=jnp.float32,
                              minval=-bound, maxval=bound)

    # Small-batch path (single block, default large tile).
    out = v_forward(s, weight, bias)
    jax.block_until_ready(out)
    ref = s.reshape(B, D) @ weight.T + bias
    assert out.shape == (B, 1)
    assert jnp.allclose(out, ref, atol=1e-5, rtol=1e-5)

    # Also exercise the tiled / padded multi-block path (grid > 1, ragged B).
    B2 = 520
    s2 = jax.random.normal(k_s2, (B2, C, X, Y, Z), dtype=jnp.float32)
    out2 = v_forward(s2, weight, bias, tile_b=256)
    jax.block_until_ready(out2)
    ref2 = s2.reshape(B2, D) @ weight.T + bias
    assert out2.shape == (B2, 1)
    assert jnp.allclose(out2, ref2, atol=1e-4, rtol=1e-4)

    print("KERNEL_OK")
</pallas_src>

<mosaic_0001>
module attributes {stable_mosaic.version = 11 : i64} {
  func.func @_v_linear_kernel(%arg0: i32, %arg1: memref<2x256xf32, #tpu.memory_space<vmem>>, %arg2: memref<1x256xf32, #tpu.memory_space<vmem>>, %arg3: memref<1xf32, #tpu.memory_space<smem>>, %arg4: memref<2x1xf32, #tpu.memory_space<vmem>>) attributes {dimension_semantics = [#tpu.dimension_semantics<parallel>], iteration_bounds = array<i64: 1>, scalar_prefetch = 0 : i64, scratch_operands = 0 : i64, tpu.core_type = #tpu.core_type<tc>, window_params = [{transform_indices = @transform_0, window_bounds = array<i64: 2, 256>}, {pipeline_mode = #tpu.pipeline_mode<synchronous>, transform_indices = @transform_1, window_bounds = array<i64: 1, 256>}, {transform_indices = @transform_2, window_bounds = array<i64: 1>}, {transform_indices = @transform_3, window_bounds = array<i64: 2, 1>}]} {
    %c0 = arith.constant 0 : index
    %c0_0 = arith.constant 0 : index
    %0 = vector.load %arg1[%c0, %c0_0] : memref<2x256xf32, #tpu.memory_space<vmem>>, vector<2x256xf32>
    %c0_1 = arith.constant 0 : index
    %c0_2 = arith.constant 0 : index
    %1 = vector.load %arg2[%c0_1, %c0_2] : memref<1x256xf32, #tpu.memory_space<vmem>>, vector<1x256xf32>
    %2 = vector.broadcast %1 : vector<1x256xf32> to vector<2x256xf32>
    %3 = arith.mulf %0, %2 : vector<2x256xf32>
    %cst = arith.constant dense<0.000000e+00> : vector<2xf32>
    %4 = vector.multi_reduction <add>, %3, %cst [1] : vector<2x256xf32> to vector<2xf32>
    %5 = vector.shape_cast %4 : vector<2xf32> to vector<2x1xf32>
    %c0_3 = arith.constant 0 : index
    %6 = memref.load %arg3[%c0_3] : memref<1xf32, #tpu.memory_space<smem>>
    %7 = vector.broadcast %6 : f32 to vector<2x1xf32>
    %8 = arith.addf %5, %7 : vector<2x1xf32>
    %c0_4 = arith.constant 0 : index
    %c0_5 = arith.constant 0 : index
    %9 = vector.load %arg4[%c0_4, %c0_5] : memref<2x1xf32, #tpu.memory_space<vmem>>, vector<2x1xf32>
    tpu.vector_store %arg4[%c0_4, %c0_5], %8 {strides = array<i32>} : memref<2x1xf32, #tpu.memory_space<vmem>>, vector<2x1xf32>,
    return
  }
  func.func @transform_0(%arg0: i32) -> (i32, i32) {
    %c0_i32 = arith.constant 0 : i32
    %c0_i32_0 = arith.constant 0 : i32
    return %arg0, %c0_i32 : i32, i32
  }
  func.func @transform_1(%arg0: i32) -> (i32, i32) {
    %c0_i32 = arith.constant 0 : i32
    %c0_i32_0 = arith.constant 0 : i32
    %c0_i32_1 = arith.constant 0 : i32
    return %c0_i32, %c0_i32_0 : i32, i32
  }
  func.func @transform_2(%arg0: i32) -> i32 {
    %c0_i32 = arith.constant 0 : i32
    %c0_i32_0 = arith.constant 0 : i32
    return %c0_i32 : i32
  }
  func.func @transform_3(%arg0: i32) -> (i32, i32) {
    %c0_i32 = arith.constant 0 : i32
    %c0_i32_0 = arith.constant 0 : i32
    return %arg0, %c0_i32 : i32, i32
  }
}

</mosaic_0001>

<llo_original>
// kernel: tpu_custom_call.1
$region0: #{tpu_custom_call.1}
  #allocation0 [shape = 'u32[]', space=smem, size = 0x4, offset = 0x4, fixed_abs, tag = 'smem constant byte address 0x4 - core index']
  #allocation1 [shape = 'u32[72,128]{1,0:T(1,128)}', space=vmem, size = 0x9000, scoped, tag = 'internal scratch']
  #allocation2 [shape = 'f32[1]{0:T(128)S(6)}', space=smem, size = 0x200, scoped, tag = 'scoped memory for tpu_custom_call.1']
  %s0 = inlined_call_operand.hbm [shape: f32[2,256], index: 0, kind: input, shape index: {}]
  %s1 = inlined_call_operand.vmem [shape: f32[1,256], index: 1, kind: input, shape index: {}]
  %s2 = inlined_call_operand.<no memory space> [shape: f32[1], index: 2, kind: input, shape index: {}]
  %s3 = inlined_call_operand.vmem [shape: f32[2,1], index: 3, kind: output, shape index: {}]
  %s4 = sld [smem:[#allocation0]]
  $region26: #{tpu_custom_call.1} parent=0
    _
  %s6 = ssub.s32 1, %s4
  %s7 = scalar_select 0, %s6, %s4
  %8 = sst [smem:[#allocation2]] %s2
  $region1: #{tpu_custom_call.1} parent=0
    #allocation3 [shape = 'u8[2048]{0}', space=vmem, size = 0x800, scoped, tag = 'input window, operand 0, single buffered']
    #allocation4 [shape = 's32[1]{0}', space=sflag, size = 0x4, scoped, tag = 'scoped memory for tpu_custom_call.1']
    %9 = vsyncpa [#allocation4], 0
    // Predicated region
    $region2: #{tpu_custom_call.1} parent=1 // pred_check
      _
    $region3: #{tpu_custom_call.1} parent=1 // pred_check_branch
      %11 = sbr.rel (0) target = $region5
    $region4: #{tpu_custom_call.1} parent=1 // pred_region
      %13 = vsyncadd [#allocation4], 0
      %s15 = sshll.u32 %s0, 4
      %s16 = int_to_ptr.hbm [resolvable:$true] %s15
      %s17 = sshll.u32 [#allocation3], 4
      %s18 = int_to_ptr.vmem [resolvable:$true] %s17
      %20 = dma.hbm_to_vmem [thread:$0]  %s16, 64, %s18, [#allocation4]
    $region5: #{tpu_custom_call.1} parent=1 // pred_fallthru
      _
    // Predicated region
    $region6: #{tpu_custom_call.1} parent=1 // pred_check
      _
    $region7: #{tpu_custom_call.1} parent=1 // pred_check_branch
      %22 = sbr.rel (0) target = $region9
    $region8: #{tpu_custom_call.1} parent=1 // pred_region
      _
    $region9: #{tpu_custom_call.1} parent=1 // pred_fallthru
      _
    // Predicated region
    $region10: #{tpu_custom_call.1} parent=1 // pred_check
      _
    $region11: #{tpu_custom_call.1} parent=1 // pred_check_branch
      %24 = sbr.rel (0) target = $region13
    $region12: #{tpu_custom_call.1} parent=1 // pred_region
      _
    $region13: #{tpu_custom_call.1} parent=1 // pred_fallthru
      _
    // Predicated region
    $region14: #{tpu_custom_call.1} parent=1 // pred_check
      _
    $region15: #{tpu_custom_call.1} parent=1 // pred_check_branch
      %26 = sbr.rel (0) target = $region17
    $region16: #{tpu_custom_call.1} parent=1 // pred_region
      %28 = dma.done [#allocation4], 64
    $region17: #{tpu_custom_call.1} parent=1 // pred_fallthru
      _
    %v29 = vld [vmem:[#allocation3] sm:$0xf]
    %v30 = vld [vmem:[%s1] sm:$0x3]
    %v32 = vperm.slane %v30, 0
    %v33 = vperm.slane %v30, 1
    %v34 = vrot.slane %v33, 6
    %vm35 = vcmask 1041408
    %v36 = vsel %vm35, %v32, %v34
    %v38 = vmul.f32 %v29, %v36
    %40 = vst [vmem:[#allocation1] ss:$4 sm:$0xff] %v38
    %v41 = vld.sshfl [vmem:[#allocation1] sm:$0xff pattern:$0x73625140]
    %v42 = vld.sshfl [vmem:[#allocation1 + $0x8] sm:$0xff pattern:$0x73625140]
    %v45 = vsel %vm35, %v41, 0.0
    %v46 = vsel %vm35, %v42, 0.0
    %v47 = vadd.f32 %v45, %v46
    %48 = vadd.xlane.f32.xlu0 %v47
    %v49 = vpop.xlane.xlu0 %48
    %s50 = sld [smem:[#allocation2]]
    %v51 = vstv %s50
    %v52 = vadd.f32 %v49, %v51
    %vm53 = vcmask 1024
    %54 = vst.msk [vmem:[%s3] sm:$0x3] %vm53, %v52
    // Predicated region
    $region18: #{tpu_custom_call.1} parent=1 // pred_check
      _
    $region19: #{tpu_custom_call.1} parent=1 // pred_check_branch
      %56 = sbr.rel (0) target = $region21
    $region20: #{tpu_custom_call.1} parent=1 // pred_region
      _
    $region21: #{tpu_custom_call.1} parent=1 // pred_fallthru
      _
    // Predicated region
    $region22: #{tpu_custom_call.1} parent=1 // pred_check
      _
    $region23: #{tpu_custom_call.1} parent=1 // pred_check_branch
      %58 = sbr.rel (0) target = $region25
    $region24: #{tpu_custom_call.1} parent=1 // pred_region
      _
    $region25: #{tpu_custom_call.1} parent=1 // pred_fallthru
      _
    %59 = vsyncpa [#allocation4], 1

</llo_original>
